<compile_context>
chip_gen: v6e
topology: v6e:2x2x1
jax: 0.10.0
libtpu: 0.0.40
codegen_flags: <defaults>
</compile_context>

<pallas_src>
import jax
import jax.numpy as jnp
from jax.experimental import pallas as pl
from jax.experimental.pallas import tpu as pltpu


def _final_layer_kernel(x_ref, w_ref, b_ref, o_ref):
    # x_ref: (1, TN, H)   one sequence tile of one batch element
    # w_ref: (1, H, O)    per-batch modulation-folded weight (x.dtype)
    # b_ref: (1, 1, O)    per-batch folded bias (f32)
    # o_ref: (1, TN, O)
    x = x_ref[0]                                           # (TN, H) native dtype
    xf = x.astype(jnp.float32)

    # One-pass LayerNorm stats (biased variance, matches torch LayerNorm).
    mean = jnp.mean(xf, axis=-1, keepdims=True)            # (TN, 1)
    meansq = jnp.mean(xf * xf, axis=-1, keepdims=True)     # (TN, 1)
    var = jnp.maximum(meansq - mean * mean, 0.0)
    inv_std = jax.lax.rsqrt(var + 1e-6)                    # (TN, 1)

    # Fused normalization: row-broadcast mul + sub, no `centered` temporary.
    xn = (xf * inv_std - mean * inv_std).astype(x.dtype)   # (TN, H)

    # Modulation is folded into w/b, so this is the whole rest of the layer.
    out = jnp.dot(xn, w_ref[0], preferred_element_type=jnp.float32)  # (TN, O) f32
    out = out + b_ref[0].astype(jnp.float32)                          # (1, O) bcast
    o_ref[0] = out.astype(o_ref.dtype)


def _choose_tile_n(n, dtype):
    """Sequence tile: <=512 rows, dtype-aware quantum, divisor of N if possible.

    Returns (TN, needs_pad).  TN == n (full extent) is always legal; otherwise
    TN is a multiple of the sublane quantum (8 f32 / 16 bf16 / 32 int8).
    """
    itemsize = jnp.dtype(dtype).itemsize
    quantum = max(8, 32 // max(1, itemsize))
    cap = 512  # safe on v7x (64 MiB VMEM); ~85% of HBM roofline per tile sweep
    if n <= cap:
        return n, False
    tn = cap - (cap % quantum)
    while tn >= quantum:
        if n % tn == 0:
            return tn, False          # no padding needed
        tn -= quantum
    # Rare fallback (N has no aligned divisor <= cap): pad the last tile.
    return cap - (cap % quantum), True


def t2i_final_layer(x, t, shift_scale_table, w, b):
    """x: (B, N, H), t: (B, H), shift_scale_table: (2, H), w: (H, O), b: (O,)."""
    B, N, H = x.shape
    O = w.shape[1]

    # ---- fold the t2i modulation into the linear (per-batch, cheap in XLA) ----
    #   (xn * (1 + scale) + shift) @ W + b
    #     == xn @ (W * (1 + scale)[:, None])  +  (shift @ W + b)
    wf = w.astype(jnp.float32)
    tf = t.astype(jnp.float32)
    tablef = shift_scale_table.astype(jnp.float32)
    shift = tablef[0][None, :] + tf                          # (B, H)
    scale = tablef[1][None, :] + tf                          # (B, H)
    w_fold = (wf[None, :, :] * (1.0 + scale)[:, :, None]).astype(x.dtype)  # (B, H, O)
    b_fold = (shift @ wf + b.astype(jnp.float32)[None, :]).reshape(B, 1, O)  # (B,1,O) f32

    # ---- sequence tiling (prefer a divisor of N; pad only as a fallback) ----
    TN, needs_pad = _choose_tile_n(N, x.dtype)
    n_tiles = pl.cdiv(N, TN)
    N_pad = n_tiles * TN
    if needs_pad and N_pad != N:
        # Padded rows normalize to 0 and produce bias-only (finite) outputs;
        # they are sliced off below.  Only hit when N has no aligned divisor.
        x = jnp.pad(x, ((0, 0), (0, N_pad - N), (0, 0)))

    x_isz = jnp.dtype(x.dtype).itemsize
    w_isz = jnp.dtype(w_fold.dtype).itemsize

    # VMEM budget: pipelined double-buffers plus the kernel's f32 temporaries
    # (xf, xn, stat vectors, pre-cast matmul result).  Keep well under the
    # 64 MiB physical VMEM of v7x.
    tile_bytes = (2 * TN * H * x_isz            # x double-buffer
                  + 2 * TN * O * x_isz          # output double-buffer
                  + 2 * H * O * w_isz           # folded-weight double-buffer
                  + 2 * O * 4                   # folded-bias double-buffer
                  + 3 * TN * H * 4              # f32 temporaries inside the body
                  + TN * O * 4)                 # f32 matmul accumulator
    vmem_limit = int(min(40 * 1024 * 1024,
                         max(8 * 1024 * 1024, int(1.5 * tile_bytes))))

    cost = pl.CostEstimate(
        flops=2 * B * N_pad * H * O + 6 * B * N_pad * H,
        transcendentals=B * N_pad,
        bytes_accessed=(x.size * x_isz
                        + w_fold.size * w_isz
                        + b_fold.size * 4
                        + B * N_pad * O * x_isz),
    )

    out = pl.pallas_call(
        _final_layer_kernel,
        out_shape=jax.ShapeDtypeStruct((B, N_pad, O), x.dtype),
        grid_spec=pltpu.PrefetchScalarGridSpec(
            num_scalar_prefetch=0,
            # n_tiles outermost so the megacore splits the long sequence axis
            # evenly across TensorCores even when B == 1.
            grid=(n_tiles, B),
            in_specs=[
                pl.BlockSpec((1, TN, H), lambda ni, bi: (bi, ni, 0)),  # x tile
                pl.BlockSpec((1, H, O), lambda ni, bi: (bi, 0, 0)),    # folded W (per batch)
                pl.BlockSpec((1, 1, O), lambda ni, bi: (bi, 0, 0)),    # folded b (per batch)
            ],
            out_specs=pl.BlockSpec((1, TN, O), lambda ni, bi: (bi, ni, 0)),
        ),
        compiler_params=pltpu.CompilerParams(
            dimension_semantics=("parallel", "parallel"),
            vmem_limit_bytes=vmem_limit,
        ),
        cost_estimate=cost,
    )(x, w_fold, b_fold)

    if N_pad != N:
        out = out[:, :N, :]
    return out


def _reference(x, t, table, w, b):
    ss = table[None] + t[:, None]           # (B, 2, H)
    shift = ss[:, 0:1, :]                   # (B, 1, H)
    scale = ss[:, 1:2, :]                   # (B, 1, H)
    mean = jnp.mean(x, axis=-1, keepdims=True)
    var = jnp.mean((x - mean) ** 2, axis=-1, keepdims=True)
    xn = (x - mean) * jax.lax.rsqrt(var + 1e-6)
    xm = xn * (1 + scale) + shift
    return xm @ w + b


if __name__ == "__main__":
    # Small, module-consistent shapes.
    B = 2              # batch
    N = 8              # sequence length (num patches)
    H = 32             # hidden_size
    P = 2              # patch_size
    C_OUT = 4          # out_channels
    O = P * P * C_OUT  # 16

    key = jax.random.PRNGKey(0)
    k_x, k_t, k_tab, k_w, k_b = jax.random.split(key, 5)

    x = jax.random.normal(k_x, (B, N, H), dtype=jnp.float32)
    t = jax.random.normal(k_t, (B, H), dtype=jnp.float32)

    # Parameter init (matches __init__ shapes):
    #   shift_scale_table ~ randn(2, H) / sqrt(H)
    #   linear: weight (O, H) + bias (O,)  -> passed transposed as (H, O)
    shift_scale_table = jax.random.normal(k_tab, (2, H), dtype=jnp.float32) / (H ** 0.5)
    w_t = jax.random.normal(k_w, (H, O), dtype=jnp.float32) * 0.02
    b = jax.random.normal(k_b, (O,), dtype=jnp.float32) * 0.02

    out = t2i_final_layer(x, t, shift_scale_table, w_t, b)
    out = jax.block_until_ready(out)

    ref = _reference(x, t, shift_scale_table, w_t, b)
    assert out.shape == (B, N, O)
    assert jnp.allclose(out, ref, atol=1e-3, rtol=1e-3), "mismatch vs reference"

    print("KERNEL_OK")
</pallas_src>

<mosaic_0001>
module attributes {stable_mosaic.version = 11 : i64} {
  func.func @_final_layer_kernel(%arg0: i32, %arg1: i32, %arg2: memref<1x8x32xf32, #tpu.memory_space<vmem>>, %arg3: memref<1x32x16xf32, #tpu.memory_space<vmem>>, %arg4: memref<1x1x16xf32, #tpu.memory_space<vmem>>, %arg5: memref<1x8x16xf32, #tpu.memory_space<vmem>>) attributes {dimension_semantics = [#tpu.dimension_semantics<parallel>, #tpu.dimension_semantics<parallel>], iteration_bounds = array<i64: 1, 2>, scalar_prefetch = 0 : i64, scratch_operands = 0 : i64, tpu.core_type = #tpu.core_type<tc>, window_params = [{transform_indices = @transform_0, window_bounds = array<i64: 1, 8, 32>}, {transform_indices = @transform_1, window_bounds = array<i64: 1, 32, 16>}, {transform_indices = @transform_2, window_bounds = array<i64: 1, 1, 16>}, {transform_indices = @transform_3, window_bounds = array<i64: 1, 8, 16>}]} {
    %c0 = arith.constant 0 : index
    %c0_0 = arith.constant 0 : index
    %c0_1 = arith.constant 0 : index
    %0 = vector.load %arg2[%c0, %c0_0, %c0_1] : memref<1x8x32xf32, #tpu.memory_space<vmem>>, vector<1x8x32xf32>
    %1 = vector.shape_cast %0 : vector<1x8x32xf32> to vector<8x32xf32>
    %cst = arith.constant dense<0.000000e+00> : vector<8xf32>
    %2 = vector.multi_reduction <add>, %1, %cst [1] : vector<8x32xf32> to vector<8xf32>
    %3 = vector.shape_cast %2 : vector<8xf32> to vector<8x1xf32>
    %cst_2 = arith.constant 3.200000e+01 : f32
    %4 = vector.broadcast %cst_2 : f32 to vector<8x1xf32>
    %5 = arith.divf %3, %4 : vector<8x1xf32>
    %6 = arith.mulf %1, %1 : vector<8x32xf32>
    %cst_3 = arith.constant dense<0.000000e+00> : vector<8xf32>
    %7 = vector.multi_reduction <add>, %6, %cst_3 [1] : vector<8x32xf32> to vector<8xf32>
    %8 = vector.shape_cast %7 : vector<8xf32> to vector<8x1xf32>
    %cst_4 = arith.constant 3.200000e+01 : f32
    %9 = vector.broadcast %cst_4 : f32 to vector<8x1xf32>
    %10 = arith.divf %8, %9 : vector<8x1xf32>
    %11 = arith.mulf %5, %5 : vector<8x1xf32>
    %12 = arith.subf %10, %11 : vector<8x1xf32>
    %cst_5 = arith.constant 0.000000e+00 : f32
    %13 = vector.broadcast %cst_5 : f32 to vector<8x1xf32>
    %14 = arith.maximumf %12, %13 : vector<8x1xf32>
    %cst_6 = arith.constant 9.99999997E-7 : f32
    %15 = vector.broadcast %cst_6 : f32 to vector<8x1xf32>
    %16 = arith.addf %14, %15 : vector<8x1xf32>
    %17 = math.rsqrt %16 : vector<8x1xf32>
    %18 = vector.broadcast %17 : vector<8x1xf32> to vector<8x32xf32>
    %19 = arith.mulf %1, %18 : vector<8x32xf32>
    %20 = arith.mulf %5, %17 : vector<8x1xf32>
    %21 = vector.broadcast %20 : vector<8x1xf32> to vector<8x32xf32>
    %22 = arith.subf %19, %21 : vector<8x32xf32>
    %c0_7 = arith.constant 0 : index
    %c0_8 = arith.constant 0 : index
    %c0_9 = arith.constant 0 : index
    %23 = vector.load %arg3[%c0_7, %c0_8, %c0_9] : memref<1x32x16xf32, #tpu.memory_space<vmem>>, vector<1x32x16xf32>
    %24 = vector.shape_cast %23 : vector<1x32x16xf32> to vector<32x16xf32>
    %cst_10 = arith.constant dense<0.000000e+00> : vector<8x16xf32>
    %25 = tpu.matmul %22, %24, %cst_10 {dimension_numbers = #tpu.dot_dimension_numbers<[1], [0], [0], [1], [0, 0, 1, 1], [], []>} : vector<8x32xf32>, vector<32x16xf32>, vector<8x16xf32> -> vector<8x16xf32>
    %c0_11 = arith.constant 0 : index
    %c0_12 = arith.constant 0 : index
    %c0_13 = arith.constant 0 : index
    %26 = vector.load %arg4[%c0_11, %c0_12, %c0_13] : memref<1x1x16xf32, #tpu.memory_space<vmem>>, vector<1x1x16xf32>
    %27 = vector.shape_cast %26 : vector<1x1x16xf32> to vector<1x16xf32>
    %28 = vector.broadcast %27 : vector<1x16xf32> to vector<8x16xf32>
    %29 = arith.addf %25, %28 : vector<8x16xf32>
    %c0_14 = arith.constant 0 : index
    %c0_15 = arith.constant 0 : index
    %c0_16 = arith.constant 0 : index
    %30 = vector.load %arg5[%c0_14, %c0_15, %c0_16] : memref<1x8x16xf32, #tpu.memory_space<vmem>>, vector<1x8x16xf32>
    %31 = vector.shape_cast %30 : vector<1x8x16xf32> to vector<8x16xf32>
    %32 = vector.shape_cast %29 : vector<8x16xf32> to vector<1x8x16xf32>
    tpu.vector_store %arg5[%c0_14, %c0_15, %c0_16], %32 {strides = array<i32>} : memref<1x8x16xf32, #tpu.memory_space<vmem>>, vector<1x8x16xf32>,
    return
  }
  func.func @transform_0(%arg0: i32, %arg1: i32) -> (i32, i32, i32) {
    %c0_i32 = arith.constant 0 : i32
    %c0_i32_0 = arith.constant 0 : i32
    return %arg1, %arg0, %c0_i32 : i32, i32, i32
  }
  func.func @transform_1(%arg0: i32, %arg1: i32) -> (i32, i32, i32) {
    %c0_i32 = arith.constant 0 : i32
    %c0_i32_0 = arith.constant 0 : i32
    %c0_i32_1 = arith.constant 0 : i32
    return %arg1, %c0_i32, %c0_i32_0 : i32, i32, i32
  }
  func.func @transform_2(%arg0: i32, %arg1: i32) -> (i32, i32, i32) {
    %c0_i32 = arith.constant 0 : i32
    %c0_i32_0 = arith.constant 0 : i32
    %c0_i32_1 = arith.constant 0 : i32
    return %arg1, %c0_i32, %c0_i32_0 : i32, i32, i32
  }
  func.func @transform_3(%arg0: i32, %arg1: i32) -> (i32, i32, i32) {
    %c0_i32 = arith.constant 0 : i32
    %c0_i32_0 = arith.constant 0 : i32
    return %arg1, %arg0, %c0_i32 : i32, i32, i32
  }
}

</mosaic_0001>

<llo_original>
// kernel: tpu_custom_call.1
$region0: #{tpu_custom_call.1}
  #allocation0 [shape = 'u32[]', space=smem, size = 0x4, offset = 0x4, fixed_abs, tag = 'smem constant byte address 0x4 - core index']
  #allocation1 [shape = 'u32[144,128]{1,0:T(1,128)}', space=vmem, size = 0x12000, scoped, tag = 'internal scratch']
  %s0 = inlined_call_operand.vmem [shape: f32[2,8,32], index: 0, kind: input, shape index: {}]
  %s1 = inlined_call_operand.vmem [shape: f32[2,32,16], index: 1, kind: input, shape index: {}]
  %s2 = inlined_call_operand.vmem [shape: f32[2,1,16], index: 2, kind: input, shape index: {}]
  %s3 = inlined_call_operand.hbm [shape: f32[2,8,16], index: 3, kind: output, shape index: {}]
  %s4 = sld [smem:[#allocation0]]
  $region45: #{tpu_custom_call.1} parent=0
    _
  %s6 = ssub.s32 1, %s4
  %s7 = scalar_select 0, %s6, %s4
  $region1: #{tpu_custom_call.1} parent=0
    #allocation2 [shape = 'u8[8192]{0}', space=vmem, size = 0x2000, scoped, tag = 'output window, operand 0']
    #allocation3 [shape = 's32[2]{0}', space=sflag, size = 0x8, scoped, tag = 'scoped memory for tpu_custom_call.1']
    %8 = vsyncpa [#allocation3], 0
    %s9 = scalar_lea.sflag [#allocation3], 1
    %10 = vsyncpa %s9, 0
    loop: start=0, step=1, limit=4
    $region2: #{tpu_custom_call.1} parent=1 // loop_pre_header
      _
    $region3: #{tpu_custom_call.1} parent=1 // loop_header
      %s12 = sphi 0, %s16
      %p13 = scmp.ge.s32.totalorder %s12, 4
      %s19 = sphi 0, %s31
      %s20 = sphi 0, %s27
      %s21 = sphi 0, %s19
      %s22 = sphi 0, %s20
      %s23 = sphi 0, %s21
      %s24 = sphi 0, %s22
      %s36 = sphi 0, %s38
      %s39 = sphi 0, %s36
      %s40 = sphi 0, %s39
      %s56 = sphi 0, %s40
      %s62 = sphi 0, %s64
      %s65 = sphi 0, %s62
      %s66 = sphi 0, %s65
      %s82 = sphi 0, %s66
      %s88 = sphi 0, %s90
      %s91 = sphi 0, %s88
      %s92 = sphi 0, %s91
      %s108 = sphi 0, %s92
      %s116 = sphi 0, %s118
      %s119 = sphi 0, %s116
      %s120 = sphi 0, %s119
      %s136 = sphi 0, %s120
    $region4: #{tpu_custom_call.1} parent=1 // loop_header_branch
      %15 = sbr.rel (%p13) target = $region8
    $region5: #{tpu_custom_call.1} parent=1 // loop_body
      %s17 = ssub.s32 %s12, 1
      %s18 = ssub.s32 %s12, 2
      %s25 = sadd.s32 1, %s20
      %p26 = scmp.ge.s32.totalorder %s25, 2
      %s27 = scalar_select %p26, 0, %s25
      %s28 = sadd.s32 1, %s19
      %s29 = scalar_select %p26, %s28, %s19
      %p30 = scmp.ge.s32.totalorder %s29, 1
      %s31 = scalar_select %p30, 0, %s29
      %s32 = ssub.s32 %s20, %s27
      %s33 = ssub.s32 %s19, %s31
      %s34 = sor.u32 %s32, %s33
      %p35 = scmp.eq.s32.totalorder %s34, 0
      %s37 = sadd.s32 %s36, 1
      %s38 = scalar_select %p35, %s36, %s37
      %p41 = pneg %p35
      %p42 = scmp.eq.s32.totalorder %s12, 1
      %p43 = por %p41, %p42
      %p44 = scmp.ne.s32.totalorder %s36, %s39
      %p45 = scmp.eq.s32.totalorder %s12, 0
      %p46 = por %p44, %p45
      %p47 = scmp.ne.s32.totalorder %s36, %s39
      %p48 = scmp.eq.s32.totalorder %s17, 1
      %p49 = por %p47, %p48
      %p50 = scmp.ne.s32.totalorder %s39, %s40
      %p51 = scmp.eq.s32.totalorder %s17, 0
      %p52 = por %p50, %p51
      %p53 = scmp.ne.s32.totalorder %s39, %s40
      %p54 = scmp.eq.s32.totalorder %s18, 1
      %p55 = por %p53, %p54
      %p57 = scmp.ne.s32.totalorder %s40, %s56
      %p58 = scmp.eq.s32.totalorder %s18, 0
      %p59 = por %p57, %p58
      %s60 = ssub.s32 %s20, %s27
      %p61 = scmp.eq.s32.totalorder %s60, 0
      %s63 = sadd.s32 %s62, 1
      %s64 = scalar_select %p61, %s62, %s63
      %p67 = pneg %p61
      %p68 = scmp.eq.s32.totalorder %s12, 1
      %p69 = por %p67, %p68
      %p70 = scmp.ne.s32.totalorder %s62, %s65
      %p71 = scmp.eq.s32.totalorder %s12, 0
      %p72 = por %p70, %p71
      %p73 = scmp.ne.s32.totalorder %s62, %s65
      %p74 = scmp.eq.s32.totalorder %s17, 1
      %p75 = por %p73, %p74
      %p76 = scmp.ne.s32.totalorder %s65, %s66
      %p77 = scmp.eq.s32.totalorder %s17, 0
      %p78 = por %p76, %p77
      %p79 = scmp.ne.s32.totalorder %s65, %s66
      %p80 = scmp.eq.s32.totalorder %s18, 1
      %p81 = por %p79, %p80
      %p83 = scmp.ne.s32.totalorder %s66, %s82
      %p84 = scmp.eq.s32.totalorder %s18, 0
      %p85 = por %p83, %p84
      %s86 = ssub.s32 %s20, %s27
      %p87 = scmp.eq.s32.totalorder %s86, 0
      %s89 = sadd.s32 %s88, 1
      %s90 = scalar_select %p87, %s88, %s89
      %p93 = pneg %p87
      %p94 = scmp.eq.s32.totalorder %s12, 1
      %p95 = por %p93, %p94
      %p96 = scmp.ne.s32.totalorder %s88, %s91
      %p97 = scmp.eq.s32.totalorder %s12, 0
      %p98 = por %p96, %p97
      %p99 = scmp.ne.s32.totalorder %s88, %s91
      %p100 = scmp.eq.s32.totalorder %s17, 1
      %p101 = por %p99, %p100
      %p102 = scmp.ne.s32.totalorder %s91, %s92
      %p103 = scmp.eq.s32.totalorder %s17, 0
      %p104 = por %p102, %p103
      %p105 = scmp.ne.s32.totalorder %s91, %s92
      %p106 = scmp.eq.s32.totalorder %s18, 1
      %p107 = por %p105, %p106
      %p109 = scmp.ne.s32.totalorder %s92, %s108
      %p110 = scmp.eq.s32.totalorder %s18, 0
      %p111 = por %p109, %p110
      %s112 = ssub.s32 %s20, %s27
      %s113 = ssub.s32 %s19, %s31
      %s114 = sor.u32 %s112, %s113
      %p115 = scmp.eq.s32.totalorder %s114, 0
      %s117 = sadd.s32 %s116, 1
      %s118 = scalar_select %p115, %s116, %s117
      %p121 = pneg %p115
      %p122 = scmp.eq.s32.totalorder %s12, 1
      %p123 = por %p121, %p122
      %p124 = scmp.ne.s32.totalorder %s116, %s119
      %p125 = scmp.eq.s32.totalorder %s12, 0
      %p126 = por %p124, %p125
      %p127 = scmp.ne.s32.totalorder %s116, %s119
      %p128 = scmp.eq.s32.totalorder %s17, 1
      %p129 = por %p127, %p128
      %p130 = scmp.ne.s32.totalorder %s119, %s120
      %p131 = scmp.eq.s32.totalorder %s17, 0
      %p132 = por %p130, %p131
      %p133 = scmp.ne.s32.totalorder %s119, %s120
      %p134 = scmp.eq.s32.totalorder %s18, 1
      %p135 = por %p133, %p134
      %p137 = scmp.ne.s32.totalorder %s120, %s136
      %p138 = scmp.eq.s32.totalorder %s18, 0
      %p139 = por %p137, %p138
      %p140 = scmp.le.s32.totalorder 1, %s12
      %p141 = scmp.lt.s32.totalorder %s12, 3
      %p142 = pnand %p140, %p141
      %p143 = pneg %p142
      // Predicated region
      $region9: #{tpu_custom_call.1} parent=5 // pred_check
        _
      $region10: #{tpu_custom_call.1} parent=5 // pred_check_branch
        %145 = sbr.rel (%p142) target = $region12
      $region11: #{tpu_custom_call.1} parent=5 // pred_region
        %s146 = ssub.s32 %s12, 1
      $region12: #{tpu_custom_call.1} parent=5 // pred_fallthru
        _
      %p147 = scmp.lt.s32.totalorder %s12, 2
      // Predicated region
      $region13: #{tpu_custom_call.1} parent=5 // pred_check
        %p148 = pneg %p147
      $region14: #{tpu_custom_call.1} parent=5 // pred_check_branch
        %150 = sbr.rel (%p148) target = $region16
      $region15: #{tpu_custom_call.1} parent=5 // pred_region
        // Predicated region
        $region17: #{tpu_custom_call.1} parent=15 // pred_check
          %p151 = pneg %p46
        $region18: #{tpu_custom_call.1} parent=15 // pred_check_branch
          %153 = sbr.rel (%p151) target = $region20
        $region19: #{tpu_custom_call.1} parent=15 // pred_region
          %p154 = scmp.lt.s32.totalorder %s20, 1
          %s155 = scalar_select %p154, %s20, 1
          %p156 = scmp.lt.s32.totalorder %s19, 0
          %s157 = scalar_select %p156, %s19, 0
          %s158 = sadd.s32 %s157, %s155
          %s159 = smul.addr %s158, 8
          %s160 = scalar_lea.vmem %s0, %s159
        $region20: #{tpu_custom_call.1} parent=15 // pred_fallthru
          _
        // Predicated region
        $region21: #{tpu_custom_call.1} parent=15 // pred_check
          %p161 = pneg %p72
        $region22: #{tpu_custom_call.1} parent=15 // pred_check_branch
          %163 = sbr.rel (%p161) target = $region24
        $region23: #{tpu_custom_call.1} parent=15 // pred_region
          %p164 = scmp.lt.s32.totalorder %s20, 1
          %s165 = scalar_select %p164, %s20, 1
          %s166 = smul.addr %s165, 4
          %s167 = smul.addr %s166, 8
          %s168 = scalar_lea.vmem %s1, %s167
        $region24: #{tpu_custom_call.1} parent=15 // pred_fallthru
          _
        // Predicated region
        $region25: #{tpu_custom_call.1} parent=15 // pred_check
          %p169 = pneg %p98
        $region26: #{tpu_custom_call.1} parent=15 // pred_check_branch
          %171 = sbr.rel (%p169) target = $region28
        $region27: #{tpu_custom_call.1} parent=15 // pred_region
          %p172 = scmp.lt.s32.totalorder %s20, 1
          %s173 = scalar_select %p172, %s20, 1
          %s174 = scalar_lea.vmem %s2, %s173
        $region28: #{tpu_custom_call.1} parent=15 // pred_fallthru
          _
      $region16: #{tpu_custom_call.1} parent=5 // pred_fallthru
        _
      %p175 = scmp.le.s32.totalorder 1, %s12
      %p176 = scmp.lt.s32.totalorder %s12, 3
      %p177 = pnand %p175, %p176
      %p178 = pneg %p177
      // Predicated region
      $region29: #{tpu_custom_call.1} parent=5 // pred_check
        _
      $region30: #{tpu_custom_call.1} parent=5 // pred_check_branch
        %180 = sbr.rel (%p177) target = $region32
      $region31: #{tpu_custom_call.1} parent=5 // pred_region
        %s181 = ssub.s32 %s12, 1
        %p182 = scmp.lt.s32.totalorder %s22, 1
        %s183 = scalar_select %p182, %s22, 1
        %p184 = scmp.lt.s32.totalorder %s21, 0
        %s185 = scalar_select %p184, %s21, 0
        %s186 = sadd.s32 %s185, %s183
        %s187 = smul.addr %s186, 8
        %s188 = scalar_lea.vmem %s0, %s187
        %p189 = pneg %p52
        %p190 = pneg %p49
        %p191 = scmp.lt.s32.totalorder %s22, 1
        %s192 = scalar_select %p191, %s22, 1
        %s193 = smul.addr %s192, 4
        %s194 = smul.addr %s193, 8
        %s195 = scalar_lea.vmem %s1, %s194
        %p196 = pneg %p78
        %p197 = pneg %p75
        %p198 = scmp.lt.s32.totalorder %s22, 1
        %s199 = scalar_select %p198, %s22, 1
        %s200 = scalar_lea.vmem %s2, %s199
        %p201 = pneg %p104
        %p202 = pneg %p101
        %p203 = pneg %p132
        %p204 = pneg %p129
        %s205 = sand.u32 %s119, 1
        %s206 = scalar_lea.sflag [#allocation3], %s205
        %s207 = sand.u32 %s119, 1
        %s208 = smul.addr %s207, 8
        %s209 = scalar_lea.vmem [#allocation2], %s208
        %p210 = scmp.lt.s32.totalorder %s22, 1
        %s211 = scalar_select %p210, %s22, 1
        %p212 = scmp.lt.s32.totalorder %s21, 0
        %s213 = scalar_select %p212, %s21, 0
        %s214 = sadd.s32 %s213, %s211
        %s215 = smul.addr %s214, 8
        %s216 = scalar_lea.vmem %s0, %s215
        %p217 = scmp.lt.s32.totalorder %s22, 1
        %s218 = scalar_select %p217, %s22, 1
        %s219 = smul.addr %s218, 4
        %s220 = smul.addr %s219, 8
        %s221 = scalar_lea.vmem %s1, %s220
        %p222 = scmp.lt.s32.totalorder %s22, 1
        %s223 = scalar_select %p222, %s22, 1
        %s224 = scalar_lea.vmem %s2, %s223
        %v225 = vld [vmem:[%s216] sm:$0xff]
        %vm226 = vcmask 261120
        %v227 = vsel %vm226, %v225, 0.0
        %228 = vadd.xlane.f32.xlu0 %v227
        %v229 = vpop.xlane.xlu0 %228
        %v230 = vrcp.pop 32.0
        %v231 = vmul.f32 %v229, %v230
        %v232 = vmul.f32 %v225, %v225
        %v233 = vsel %vm226, %v232, 0.0
        %234 = vadd.xlane.f32.xlu0 %v233
        %v235 = vpop.xlane.xlu0 %234
        %v236 = vmul.f32 %v235, %v230
        %v237 = vmul.f32 %v231, %v231
        %v238 = vsub.f32 %v236, %v237
        %v239 = vmax.f32 %v238, 0.0
        %v240 = vadd.f32 %v239, 1e-06
        %v241 = vrsqrt.pop %v240
        %v242 = vmul.f32 %v225, %v241
        %v243 = vmul.f32 %v231, %v241
        %v244 = vsub.f32 %v242, %v243
        %v245 = vld [vmem:[%s221] sm:$0xff]
        %v246 = vld [vmem:[%s221 + $0x8] sm:$0xff]
        %v247 = vld [vmem:[%s221 + $0x10] sm:$0xff]
        %v248 = vld [vmem:[%s221 + $0x18] sm:$0xff]
        %v249 = vld [vmem:[%s224] sm:$0x1]
        %v251 = vlaneseq
        %v252 = vshrl.u32 %v251, 7
        %v253 = vsub.s32 0, %v252
        %v254 = vrot.slane %v249, %v253
        %v257 = vsel %vm226, %v244, 0
        %259 = vmatprep.subr.mxu0 0.0
        %260 = vmatpush1.msra.mxu0 0.0
        %261 = vmatprep.subr.mxu0 0.0
        %262 = vmatpush1.msra.mxu0 0.0
        %263 = vmatprep.subr.mxu0 0.0
        %264 = vmatpush1.msra.mxu0 0.0
        %265 = vmatprep.subr.mxu0 0.0
        %266 = vmatpush1.msra.mxu0 0.0
        %267 = vmatprep.subr.mxu0 0.0
        %268 = vmatpush1.msra.mxu0 0.0
        %269 = vmatprep.subr.mxu0 0.0
        %270 = vmatpush1.msra.mxu0 0.0
        %271 = vmatprep.subr.mxu0 0.0
        %272 = vmatpush1.msra.mxu0 0.0
        %273 = vmatprep.subr.mxu0 0.0
        %274 = vmatpush1.msra.mxu0 0.0
        %275 = vmatprep.subr.mxu0 0.0
        %276 = vmatpush1.msra.mxu0 0.0
        %277 = vmatprep.subr.mxu0 0.0
        %278 = vmatpush1.msra.mxu0 0.0
        %279 = vmatprep.subr.mxu0 0.0
        %280 = vmatpush1.msra.mxu0 0.0
        %281 = vmatprep.subr.mxu0 0.0
        %282 = vmatpush1.msra.mxu0 0.0
        %283 = vmatprep.subr.mxu0 0.0
        %284 = vmatpush1.msra.mxu0 %v248
        %285 = vmatprep.subr.mxu0 0.0
        %286 = vmatpush1.msra.mxu0 %v247
        %287 = vmatprep.subr.mxu0 0.0
        %288 = vmatpush1.msra.mxu0 %v246
        %289 = vmatprep.subr.mxu0 0.0
        %290 = vmatpush1.msra.mxu0 %v245
        %291 = vmatprep.subr.mxu0 0.0
        %292 = vmatpush2.msra.mxu0 0.0
        %293 = vmatprep.subr.mxu0 0.0
        %294 = vmatpush2.msra.mxu0 0.0
        %295 = vmatprep.subr.mxu0 0.0
        %296 = vmatpush2.msra.mxu0 0.0
        %297 = vmatprep.subr.mxu0 0.0
        %298 = vmatpush2.msra.mxu0 0.0
        %299 = vmatprep.subr.mxu0 0.0
        %300 = vmatpush2.msra.mxu0 0.0
        %301 = vmatprep.subr.mxu0 0.0
        %302 = vmatpush2.msra.mxu0 0.0
        %303 = vmatprep.subr.mxu0 0.0
        %304 = vmatpush2.msra.mxu0 0.0
        %305 = vmatprep.subr.mxu0 0.0
        %306 = vmatpush2.msra.mxu0 0.0
        %307 = vmatprep.subr.mxu0 0.0
        %308 = vmatpush2.msra.mxu0 0.0
        %309 = vmatprep.subr.mxu0 0.0
        %310 = vmatpush2.msra.mxu0 0.0
        %311 = vmatprep.subr.mxu0 0.0
        %312 = vmatpush2.msra.mxu0 0.0
        %313 = vmatprep.subr.mxu0 0.0
        %314 = vmatpush2.msra.mxu0 0.0
        %315 = vmatprep.subr.mxu0 0.0
        %316 = vmatpush2.msra.mxu0 0.0
        %317 = vmatprep.subr.mxu0 0.0
        %318 = vmatpush2.msra.mxu0 0.0
        %319 = vmatprep.subr.mxu0 0.0
        %320 = vmatpush2.msra.mxu0 0.0
        %321 = vmatprep.subr.mxu0 0.0
        %322 = vmatpush2.msra.mxu0 0.0
        %323 = vmatprep.mubr.f32.mxu0 0.0
        %324 = vmatmul.mubr.f32.gmra.mxu0 %v257
        %v325 = vpop.f32.mrf.mxu0
        %v326 = vadd.f32 %v254, %v325
        %v327 = vpop.f32.mrf.mxu0
        %328 = vdwg.mxu0
        %vm329 = vcmask 130048
        %330 = vst.msk [vmem:[%s209] sm:$0xff] %vm329, %v326
        %s331 = sand.u32 %s119, 1
        %s332 = scalar_lea.sflag [#allocation3], %s331
        %s333 = sand.u32 %s119, 1
        %s334 = smul.addr %s333, 8
        %s335 = scalar_lea.vmem [#allocation2], %s334
        // Predicated region
        $region33: #{tpu_custom_call.1} parent=31 // pred_check
          %p336 = pneg %p129
        $region34: #{tpu_custom_call.1} parent=31 // pred_check_branch
          %338 = sbr.rel (%p336) target = $region36
        $region35: #{tpu_custom_call.1} parent=31 // pred_region
          %s340 = ssub.s32 128, 128
          %341 = vsyncadd %s332, %s340
          %s342 = sadd.s32 %s21, %s22
          %s343 = smul.addr %s342, 128
          %s344 = scalar_lea.hbm %s3, %s343
          %s346 = sshll.u32 %s335, 4
          %s347 = int_to_ptr.vmem [resolvable:$true] %s346
          %349 = dma.vmem_to_hbm [thread:$0]  %s347, 128, %s344, %s332
        $region36: #{tpu_custom_call.1} parent=31 // pred_fallthru
          _
      $region32: #{tpu_custom_call.1} parent=5 // pred_fallthru
        _
      %p350 = scmp.le.s32.totalorder 2, %s12
      // Predicated region
      $region37: #{tpu_custom_call.1} parent=5 // pred_check
        %p351 = pneg %p350
      $region38: #{tpu_custom_call.1} parent=5 // pred_check_branch
        %353 = sbr.rel (%p351) target = $region40
      $region39: #{tpu_custom_call.1} parent=5 // pred_region
        %s354 = ssub.s32 %s12, 2
        // Predicated region
        $region41: #{tpu_custom_call.1} parent=39 // pred_check
          %p355 = pneg %p135
        $region42: #{tpu_custom_call.1} parent=39 // pred_check_branch
          %357 = sbr.rel (%p355) target = $region44
        $region43: #{tpu_custom_call.1} parent=39 // pred_region
          %s358 = sand.u32 %s120, 1
          %s359 = scalar_lea.sflag [#allocation3], %s358
          %s360 = sand.u32 %s120, 1
          %s361 = smul.addr %s360, 8
          %s362 = scalar_lea.vmem [#allocation2], %s361
          %363 = dma.done %s359, 128
        $region44: #{tpu_custom_call.1} parent=39 // pred_fallthru
          _
      $region40: #{tpu_custom_call.1} parent=5 // pred_fallthru
        _
    $region6: #{tpu_custom_call.1} parent=1 // loop_footer
      %s16 = sadd.s32 1, %s12
    $region7: #{tpu_custom_call.1} parent=1 // loop_footer_branch
      %11 = sbr.rel target = $region3
    $region8: #{tpu_custom_call.1} parent=1 // loop_exit
      _
    %364 = vsyncpa [#allocation3], 1
    %s365 = scalar_lea.sflag [#allocation3], 1
    %366 = vsyncpa %s365, 1

</llo_original>
